<compile_context>
chip_gen: v6e
topology: v6e:2x2x1
jax: 0.10.0
libtpu: 0.0.40
codegen_flags: <defaults>
</compile_context>

<pallas_src>
import jax
import jax.numpy as jnp
from jax.experimental import pallas as pl
from jax.experimental.pallas import tpu as pltpu

MIB = 1024 * 1024


def _layer_scale_kernel(x_ref, gamma_ref, o_ref):
    # Pure VPU broadcast multiply: (rows, lanes) * (1, lanes).
    o_ref[...] = x_ref[...] * gamma_ref[...]


def _round_up(n: int, m: int) -> int:
    return ((n + m - 1) // m) * m


def _vmem_capacity_bytes() -> int:
    """Per-core VMEM capacity; fall back to the smallest (v7x, 64 MiB)."""
    try:
        info = pltpu.get_tpu_info()
        cap = getattr(info, "vmem_capacity_bytes", None)
        if cap:
            return int(cap)
    except Exception:
        pass
    return 64 * MIB


def _best_fold(n_rows: int, dim: int, max_width: int) -> int:
    """Pick k | n_rows maximizing lane density of width = k*dim (width <= max_width)."""
    if dim % 128 == 0 or n_rows <= 1:
        return 1
    best_k = 1
    best_eff = dim / _round_up(dim, 128)
    best_w = dim
    cap_k = max(1, max_width // dim)
    for k in range(2, min(n_rows, cap_k) + 1):
        if n_rows % k:
            continue
        w = k * dim
        eff = w / _round_up(w, 128)
        if eff > best_eff + 1e-9 or (abs(eff - best_eff) < 1e-9 and w > best_w):
            best_k, best_eff, best_w = k, eff, w
    return best_k


def _lane_tile(width: int, itemsize: int, rows: int, sub: int,
               target_block_bytes: int) -> int:
    """Only split the lane axis if a full-width block can't hold >= sub rows."""
    if width % 128 != 0:
        return width
    min_rows = min(max(rows, 1), sub)
    if width * itemsize * min_rows <= target_block_bytes:
        return width
    units = width // 128
    budget_units = max(1, target_block_bytes // (128 * itemsize * min_rows))
    best = 0
    d = min(units, budget_units)
    while d >= 1:
        if units % d == 0:
            best = d
            break
        d -= 1
    # Avoid degenerate narrow lane tiles (strided DMAs); prefer full width.
    if best >= 8:
        return best * 128
    return width


def _row_tile(rows: int, sub: int, per_row_bytes: int,
              target_block_bytes: int, total_bytes: int) -> int:
    if rows <= sub:
        return rows
    tr = (target_block_bytes // per_row_bytes) // sub * sub
    tr = max(sub, min(tr, rows))
    # v7x megacore: make sure both TensorCores get >= 2 pipelinable row blocks.
    want_split = total_bytes > 2 * MIB and rows >= 4 * sub
    nb = pl.cdiv(rows, tr)
    if want_split and nb < 4:
        tr = max(sub, min(tr, _round_up(pl.cdiv(rows, 4), sub)))
        nb = pl.cdiv(rows, tr)
    # Prefer an even number of row blocks so the two cores stay balanced.
    if nb > 1 and nb % 2 == 1:
        tr2 = max(sub, _round_up(pl.cdiv(rows, nb + 1), sub))
        if tr2 < rows and pl.cdiv(rows, tr2) % 2 == 0:
            tr = tr2
    return tr


def layer_scale(x: jax.Array, gamma: jax.Array) -> jax.Array:
    """LayerScale forward pass: x * gamma, gamma.shape == (x.shape[-1],)."""
    orig_shape = x.shape
    dim = orig_shape[-1]
    assert gamma.shape == (dim,), f"gamma must have shape ({dim},), got {gamma.shape}"

    # Match PyTorch/JAX type promotion (e.g. bf16 x * f32 gamma -> f32 out).
    out_dtype = jnp.promote_types(x.dtype, gamma.dtype)
    if x.size == 0:
        return (x.astype(out_dtype) * gamma.astype(out_dtype)).reshape(orig_shape)

    xp = x.astype(out_dtype)
    gp = gamma.astype(out_dtype)
    itemsize = jnp.dtype(out_dtype).itemsize
    sub = 8 * max(1, 4 // itemsize)  # sublane packing: f32 -> 8, bf16 -> 16, int8 -> 32

    x2d = xp.reshape(-1, dim)
    n_rows = x2d.shape[0]

    # ---- Generation-aware budgets -------------------------------------------
    vmem_cap = _vmem_capacity_bytes()
    # ~4 blocks live (2x double-buffered input + 2x double-buffered output).
    target_block_bytes = min(16 * MIB, max(2 * MIB, vmem_cap // 10))

    # ---- Lane-dense repack (metadata-only reshape, no extra HBM traffic) -----
    k = _best_fold(n_rows, dim, max_width=32768)
    width = k * dim
    rows = n_rows // k
    xw = x2d.reshape(rows, width)
    gamma_w = jnp.tile(gp, k).reshape(1, width)
    # TODO(synk): when no divisor of n_rows yields a 128-multiple width, the
    # remaining masked-store inefficiency could be removed by a bulk+remainder
    # split, at the cost of an extra full-tensor copy to reassemble the output.

    # ---- Lane-axis tiling (only when a full-width block can't hold sub rows) --
    lane_tile = _lane_tile(width, itemsize, rows, sub, target_block_bytes)
    lane_pad = _round_up(lane_tile, 128)          # real VMEM footprint per row
    per_row_bytes = lane_pad * itemsize

    # ---- Row tiling -----------------------------------------------------------
    total_bytes = rows * width * itemsize
    tile_rows = _row_tile(rows, sub, per_row_bytes, target_block_bytes, total_bytes)

    grid_rows = pl.cdiv(rows, tile_rows)          # ragged last block: no pad/slice
    grid_lanes = width // lane_tile               # lane_tile divides width

    # ---- VMEM limit from *padded* footprints ----------------------------------
    block_bytes = _round_up(max(tile_rows, 1), 8) * per_row_bytes
    gamma_bytes = 8 * per_row_bytes
    need = 4 * block_bytes + 2 * gamma_bytes + 2 * MIB
    vmem_limit = min(max(16 * MIB, need), max(need, vmem_cap - 4 * MIB))

    if grid_lanes == 1:
        grid = (grid_rows,)
        x_spec = pl.BlockSpec((tile_rows, lane_tile), lambda i: (i, 0))
        g_spec = pl.BlockSpec((1, lane_tile), lambda i: (0, 0))
        o_spec = pl.BlockSpec((tile_rows, lane_tile), lambda i: (i, 0))
        dim_sem = ("parallel",)
    else:
        grid = (grid_rows, grid_lanes)
        x_spec = pl.BlockSpec((tile_rows, lane_tile), lambda i, j: (i, j))
        g_spec = pl.BlockSpec((1, lane_tile), lambda i, j: (0, j))
        o_spec = pl.BlockSpec((tile_rows, lane_tile), lambda i, j: (i, j))
        dim_sem = ("parallel", "parallel")

    cost = pl.CostEstimate(
        flops=x.size,
        transcendentals=0,
        bytes_accessed=2 * x.size * itemsize + width * itemsize,
    )

    out = pl.pallas_call(
        _layer_scale_kernel,
        out_shape=jax.ShapeDtypeStruct((rows, width), out_dtype),
        grid_spec=pltpu.PrefetchScalarGridSpec(
            num_scalar_prefetch=0,
            grid=grid,
            in_specs=[x_spec, g_spec],
            out_specs=o_spec,
        ),
        compiler_params=pltpu.CompilerParams(
            dimension_semantics=dim_sem,
            vmem_limit_bytes=vmem_limit,
        ),
        cost_estimate=cost,
    )(xw, gamma_w)

    return out.reshape(orig_shape)


if __name__ == "__main__":
    # Module config: LayerScale(dim=32, init_values=1e-5) — deterministic init.
    dim = 32
    init_values = 1e-5
    gamma = init_values * jnp.ones((dim,), dtype=jnp.float32)

    # Example input: (batch=2, seq=8, dim=32).
    key = jax.random.PRNGKey(0)
    x = jax.random.normal(key, (2, 8, dim), dtype=jnp.float32)

    out = jax.block_until_ready(layer_scale(x, gamma))
    ref = x * gamma
    assert out.shape == x.shape and out.dtype == ref.dtype
    assert jnp.allclose(out, ref, atol=1e-6, rtol=1e-6)

    # Row count with no 128-multiple fold (best partial fold, masked-store path).
    x2 = jax.random.normal(jax.random.PRNGKey(1), (2, 7, dim), dtype=jnp.float32)
    out2 = jax.block_until_ready(layer_scale(x2, gamma))
    assert jnp.allclose(out2, x2 * gamma, atol=1e-6, rtol=1e-6)

    print("KERNEL_OK")
</pallas_src>

<mosaic_0001>
module attributes {stable_mosaic.version = 11 : i64} {
  func.func @_layer_scale_kernel(%arg0: i32, %arg1: memref<1x512xf32, #tpu.memory_space<vmem>>, %arg2: memref<1x512xf32, #tpu.memory_space<vmem>>, %arg3: memref<1x512xf32, #tpu.memory_space<vmem>>) attributes {dimension_semantics = [#tpu.dimension_semantics<parallel>], iteration_bounds = array<i64: 1>, scalar_prefetch = 0 : i64, scratch_operands = 0 : i64, tpu.core_type = #tpu.core_type<tc>, window_params = [{transform_indices = @transform_0, window_bounds = array<i64: 1, 512>}, {pipeline_mode = #tpu.pipeline_mode<synchronous>, transform_indices = @transform_1, window_bounds = array<i64: 1, 512>}, {transform_indices = @transform_2, window_bounds = array<i64: 1, 512>}]} {
    %c0 = arith.constant 0 : index
    %c0_0 = arith.constant 0 : index
    %0 = vector.load %arg1[%c0, %c0_0] : memref<1x512xf32, #tpu.memory_space<vmem>>, vector<1x512xf32>
    %c0_1 = arith.constant 0 : index
    %c0_2 = arith.constant 0 : index
    %1 = vector.load %arg2[%c0_1, %c0_2] : memref<1x512xf32, #tpu.memory_space<vmem>>, vector<1x512xf32>
    %2 = arith.mulf %0, %1 : vector<1x512xf32>
    %c0_3 = arith.constant 0 : index
    %c0_4 = arith.constant 0 : index
    %3 = vector.load %arg3[%c0_3, %c0_4] : memref<1x512xf32, #tpu.memory_space<vmem>>, vector<1x512xf32>
    tpu.vector_store %arg3[%c0_3, %c0_4], %2 {strides = array<i32>} : memref<1x512xf32, #tpu.memory_space<vmem>>, vector<1x512xf32>,
    return
  }
  func.func @transform_0(%arg0: i32) -> (i32, i32) {
    %c0_i32 = arith.constant 0 : i32
    %c0_i32_0 = arith.constant 0 : i32
    return %arg0, %c0_i32 : i32, i32
  }
  func.func @transform_1(%arg0: i32) -> (i32, i32) {
    %c0_i32 = arith.constant 0 : i32
    %c0_i32_0 = arith.constant 0 : i32
    %c0_i32_1 = arith.constant 0 : i32
    return %c0_i32, %c0_i32_0 : i32, i32
  }
  func.func @transform_2(%arg0: i32) -> (i32, i32) {
    %c0_i32 = arith.constant 0 : i32
    %c0_i32_0 = arith.constant 0 : i32
    return %arg0, %c0_i32 : i32, i32
  }
}

</mosaic_0001>

<llo_original>
// kernel: tpu_custom_call.1
$region0: #{tpu_custom_call.1}
  #allocation0 [shape = 'u32[]', space=smem, size = 0x4, offset = 0x4, fixed_abs, tag = 'smem constant byte address 0x4 - core index']
  #allocation1 [shape = 'u32[144,128]{1,0:T(1,128)}', space=vmem, size = 0x12000, scoped, tag = 'internal scratch']
  %s0 = inlined_call_operand.hbm [shape: f32[1,512], index: 0, kind: input, shape index: {}]
  %s1 = inlined_call_operand.hbm [shape: f32[1,512], index: 1, kind: input, shape index: {}]
  %s2 = inlined_call_operand.hbm [shape: f32[1,512], index: 2, kind: output, shape index: {}]
  %s3 = sld [smem:[#allocation0]]
  $region26: #{tpu_custom_call.1} parent=0
    _
  %s5 = ssub.s32 1, %s3
  %s6 = scalar_select 0, %s5, %s3
  $region1: #{tpu_custom_call.1} parent=0
    #allocation2 [shape = 'u8[2048]{0}', space=vmem, size = 0x800, scoped, tag = 'input window, operand 0, single buffered']
    #allocation3 [shape = 's32[1]{0}', space=sflag, size = 0x4, scoped, tag = 'scoped memory for tpu_custom_call.1']
    #allocation4 [shape = 's32[1]{0}', space=sflag, size = 0x4, scoped, tag = 'scoped memory for tpu_custom_call.1']
    #allocation5 [shape = 'u8[2048]{0}', space=vmem, size = 0x800, scoped, tag = 'input window, operand 1, single buffered']
    #allocation6 [shape = 's32[1]{0}', space=sflag, size = 0x4, scoped, tag = 'scoped memory for tpu_custom_call.1']
    #allocation7 [shape = 'u8[2048]{0}', space=vmem, size = 0x800, scoped, tag = 'output window, operand 0, single buffered']
    %7 = vsyncpa [#allocation3], 0
    %8 = vsyncpa [#allocation6], 0
    %9 = vsyncpa [#allocation4], 0
    // Predicated region
    $region2: #{tpu_custom_call.1} parent=1 // pred_check
      _
    $region3: #{tpu_custom_call.1} parent=1 // pred_check_branch
      %11 = sbr.rel (0) target = $region5
    $region4: #{tpu_custom_call.1} parent=1 // pred_region
      %s13 = ssub.s32 64, 64
      %14 = vsyncadd [#allocation3], %s13
      %s16 = sshll.u32 [#allocation2], 4
      %s17 = int_to_ptr.vmem [resolvable:$true] %s16
      %19 = dma.hbm_to_vmem [thread:$0]  %s0, 64, %s17, [#allocation3]
    $region5: #{tpu_custom_call.1} parent=1 // pred_fallthru
      _
    // Predicated region
    $region6: #{tpu_custom_call.1} parent=1 // pred_check
      _
    $region7: #{tpu_custom_call.1} parent=1 // pred_check_branch
      %21 = sbr.rel (0) target = $region9
    $region8: #{tpu_custom_call.1} parent=1 // pred_region
      %s23 = ssub.s32 64, 64
      %24 = vsyncadd [#allocation6], %s23
      %s26 = sshll.u32 [#allocation5], 4
      %s27 = int_to_ptr.vmem [resolvable:$true] %s26
      %29 = dma.hbm_to_vmem [thread:$0]  %s1, 64, %s27, [#allocation6]
    $region9: #{tpu_custom_call.1} parent=1 // pred_fallthru
      _
    // Predicated region
    $region10: #{tpu_custom_call.1} parent=1 // pred_check
      _
    $region11: #{tpu_custom_call.1} parent=1 // pred_check_branch
      %31 = sbr.rel (0) target = $region13
    $region12: #{tpu_custom_call.1} parent=1 // pred_region
      %32 = dma.done [#allocation3], 64
    $region13: #{tpu_custom_call.1} parent=1 // pred_fallthru
      _
    // Predicated region
    $region14: #{tpu_custom_call.1} parent=1 // pred_check
      _
    $region15: #{tpu_custom_call.1} parent=1 // pred_check_branch
      %34 = sbr.rel (0) target = $region17
    $region16: #{tpu_custom_call.1} parent=1 // pred_region
      %35 = dma.done [#allocation6], 64
    $region17: #{tpu_custom_call.1} parent=1 // pred_fallthru
      _
    %v36 = vld [vmem:[#allocation2] sm:$0xf]
    %v37 = vld [vmem:[#allocation5] sm:$0xf]
    %v38 = vmul.f32 %v36, %v37
    %v39 = vlaneseq
    %vm40 = vcmp.ge.s32.totalorder %v39, 0
    %vm41 = vcmp.lt.s32.totalorder %v39, 512
    %vm42 = vmand %vm40, %vm41
    %43 = vst.msk [vmem:[#allocation7] sm:$0xf] %vm42, %v38
    // Predicated region
    $region18: #{tpu_custom_call.1} parent=1 // pred_check
      _
    $region19: #{tpu_custom_call.1} parent=1 // pred_check_branch
      %45 = sbr.rel (0) target = $region21
    $region20: #{tpu_custom_call.1} parent=1 // pred_region
      %s47 = ssub.s32 64, 64
      %48 = vsyncadd [#allocation4], %s47
      %s50 = sshll.u32 [#allocation7], 4
      %s51 = int_to_ptr.vmem [resolvable:$true] %s50
      %53 = dma.vmem_to_hbm [thread:$0]  %s51, 64, %s2, [#allocation4]
    $region21: #{tpu_custom_call.1} parent=1 // pred_fallthru
      _
    // Predicated region
    $region22: #{tpu_custom_call.1} parent=1 // pred_check
      _
    $region23: #{tpu_custom_call.1} parent=1 // pred_check_branch
      %55 = sbr.rel (0) target = $region25
    $region24: #{tpu_custom_call.1} parent=1 // pred_region
      %56 = dma.done [#allocation4], 64
    $region25: #{tpu_custom_call.1} parent=1 // pred_fallthru
      _
    %57 = vsyncpa [#allocation3], 1
    %58 = vsyncpa [#allocation6], 1
    %59 = vsyncpa [#allocation4], 1

</llo_original>
